<compile_context>
chip_gen: v5e
topology: v5e:2x2
jax: 0.10.0
libtpu: 0.0.40
codegen_flags: <defaults>
</compile_context>

<pallas_src>
import functools
import math

import numpy as np
import jax
import jax.numpy as jnp
from jax.experimental import pallas as pl
from jax.experimental.pallas import tpu as pltpu


# --------------------------------------------------------------------------- #
# Positional embedding (host-side numpy, cached -> no device buffers pinned)
# --------------------------------------------------------------------------- #
@functools.lru_cache(maxsize=None)
def _positional_embedding_np(num_pos, d_model):
    # matches PositionalEmbedding buffer: pe[:, 0::2]=sin, pe[:, 1::2]=cos
    position = np.arange(num_pos, dtype=np.float32)[:, None]
    div_term = np.exp(np.arange(0, d_model, 2, dtype=np.float32)
                      * -(math.log(10000.0) / d_model))
    ang = position * div_term
    pe = np.zeros((num_pos, d_model), dtype=np.float32)
    pe[:, 0::2] = np.sin(ang)
    pe[:, 1::2] = np.cos(ang)
    return pe


def _choose_group(num_patches, d_model):
    """Patch-group size G (G must divide P).  Prefer the smallest G with
    G*d_model % 128 == 0 (unmasked, lane-aligned output stores), else the
    smallest G with G*d_model >= 128, else P itself (single full-width group)."""
    divisors = [g for g in range(1, num_patches + 1) if num_patches % g == 0]
    for g in divisors:
        if (g * d_model) % 128 == 0:
            return g
    for g in divisors:
        if g * d_model >= 128:
            return g
    return divisors[-1]


def _group_block_diag_weight(weight_t, group):
    """(patch_len, d_model) -> block-diagonal (G*patch_len, G*d_model).
    Only a few KiB (vs the old P^2-scaling full block-diagonal weight)."""
    if group == 1:
        return weight_t
    patch_len, d_model = weight_t.shape
    eye = jnp.eye(group, dtype=weight_t.dtype)
    wb = jnp.einsum('pq,kn->pkqn', eye, weight_t)       # (G, patch_len, G, d_model)
    return wb.reshape(group * patch_len, group * d_model)


def _round_up(v, m):
    return -(-v // m) * m


def _vmem_limit_bytes():
    """Explicit scoped-VMEM budget: ~3/4 of physical VMEM per core
    (48 MiB on v7x's 64 MiB, 96 MiB on v5e/v6e's 128 MiB)."""
    try:
        cap = int(pltpu.get_tpu_info().vmem_capacity_bytes)
    except Exception:
        cap = 64 << 20                                   # assume the smallest (v7x)
    return int(max(32 << 20, min((cap * 3) // 4, 96 << 20)))


def _choose_block_rows(bn_rows, bytes_per_row, resident_bytes, vmem_limit,
                       min_row_steps=4):
    """Largest row block that (a) keeps double-buffered tiles + resident buffers
    + f32 temporaries under vmem_limit with headroom, and (b) leaves at least
    `min_row_steps` grid steps when BN is large enough, so each v7x TensorCore
    still gets >= 2 pipelined steps after megacore sharding (on single-core
    v5e/v6e this simply keeps the DMA/compute pipeline full)."""
    if bn_rows <= 8:
        return bn_rows                                   # full extent: always legal
    budget = max(vmem_limit - resident_bytes - (2 << 20), 1 << 20)
    tb = budget // max(bytes_per_row, 1)
    tb = min(tb, 1024, bn_rows)
    if bn_rows >= 8 * min_row_steps:
        tb = min(tb, -(-bn_rows // min_row_steps))
    return max(8, (tb // 8) * 8)                         # (8,128) sublane rule


# --------------------------------------------------------------------------- #
# Kernel
# --------------------------------------------------------------------------- #
def _make_patch_embed_kernel(num_groups, group, patch_len, stride, d_model):
    K = group * patch_len          # matmul contraction per patch group
    N = group * d_model            # output lane width per patch group
    contiguous = (stride == patch_len)

    def kernel(x_ref, w_ref, pe_ref, o_ref):
        # x_ref : (TB, L_pad)      replication-padded series rows (unfold fused here)
        # w_ref : (K, N)           tiny block-diagonal value-embedding weight (resident)
        # pe_ref: (1, P*d_model)   positional embedding (resident)
        # o_ref : (TB, P*d_model)  lane-dense output slab
        for g in range(num_groups):                      # static unroll; small count
            if contiguous:
                # non-overlapping patches: the group slab is a contiguous slice
                slab = x_ref[:, g * K:(g + 1) * K]
            else:
                # overlapping patches: static window slices, concatenated in VMEM
                cols = [x_ref[:, (g * group + j) * stride:
                                 (g * group + j) * stride + patch_len]
                        for j in range(group)]
                slab = jnp.concatenate(cols, axis=-1)
            y = jnp.dot(slab, w_ref[...], preferred_element_type=jnp.float32)
            y = y + pe_ref[:, g * N:(g + 1) * N].astype(jnp.float32)
            o_ref[:, g * N:(g + 1) * N] = y.astype(o_ref.dtype)

    return kernel


# --------------------------------------------------------------------------- #
# Wrapper
# --------------------------------------------------------------------------- #
def patch_embedding(x, weight_t, patch_len, stride, padding,
                    io_dtype=None, out_dtype=None):
    """Forward of PatchEmbedding.

    x        : (B, n_vars, L) float32 series
    weight_t : (patch_len, d_model) float32 (transpose of nn.Linear weight)
    io_dtype : optional narrower dtype for the matmul operand streams
               (e.g. jnp.bfloat16 ~ halves HBM read traffic; accumulation stays f32)
    out_dtype: output dtype (default float32; bfloat16 halves the dominant
               (BN, P*d_model) writeback stream)
    returns  : ((B*n_vars, P, d_model), n_vars)
    """
    B, n_vars, L = x.shape
    k_patch, d_model = weight_t.shape
    assert k_patch == patch_len

    # ReplicationPad1d((0, padding)); the unfold itself is fused into the kernel.
    if padding > 0:
        x = jnp.concatenate([x, jnp.repeat(x[..., -1:], padding, axis=-1)], axis=-1)
    BN = B * n_vars
    L_pad = x.shape[-1]
    P = (L_pad - patch_len) // stride + 1
    assert P >= 1
    x_rows = x.reshape(BN, L_pad)                        # free (contiguous)

    G = _choose_group(P, d_model)
    NG = P // G
    w_grp = _group_block_diag_weight(weight_t, G)        # (G*patch_len, G*d_model)
    pe = jnp.asarray(_positional_embedding_np(P, d_model)).reshape(1, P * d_model)

    if io_dtype is not None:
        x_rows = x_rows.astype(io_dtype)
        w_grp = w_grp.astype(io_dtype)
    out_dtype = jnp.float32 if out_dtype is None else jnp.dtype(out_dtype)

    in_item = jnp.dtype(x_rows.dtype).itemsize
    out_item = jnp.dtype(out_dtype).itemsize
    N_out = P * d_model
    lane = lambda c: _round_up(c, 128)

    # VMEM accounting: pipelined (double-buffered) tiles + in-kernel f32 temporaries.
    bytes_per_row = (2 * lane(L_pad) * in_item           # input tile, 2 buffers
                     + 2 * lane(N_out) * out_item        # output tile, 2 buffers
                     + lane(G * d_model) * 4             # per-group f32 accumulator
                     + lane(G * patch_len) * 4)          # per-group slab temp
    resident = (2 * _round_up(G * patch_len, 8) * lane(G * d_model) * in_item
                + 2 * 8 * lane(N_out) * 4)               # weight + positional embedding
    vmem_limit = _vmem_limit_bytes()
    TB = _choose_block_rows(BN, bytes_per_row, resident, vmem_limit)

    kernel = _make_patch_embed_kernel(NG, G, patch_len, stride, d_model)

    out_flat = pl.pallas_call(
        kernel,
        out_shape=jax.ShapeDtypeStruct((BN, N_out), out_dtype),
        grid=(pl.cdiv(BN, TB),),
        in_specs=[
            pl.BlockSpec((TB, L_pad), lambda i: (i, 0)),
            # constant index_maps -> weight / positional embedding stay resident
            pl.BlockSpec((G * patch_len, G * d_model), lambda i: (0, 0)),
            pl.BlockSpec((1, N_out), lambda i: (0, 0)),
        ],
        out_specs=pl.BlockSpec((TB, N_out), lambda i: (i, 0)),
        compiler_params=pltpu.CompilerParams(
            dimension_semantics=("parallel",),
            vmem_limit_bytes=vmem_limit),
    )(x_rows, w_grp, pe)

    out = out_flat.reshape(BN, P, d_model)               # free (contiguous)
    # TODO(synk): nn.Dropout is identity here (p=0 / eval mode); no RNG mask applied.
    return out, n_vars


# --------------------------------------------------------------------------- #
# Reference + self-test
# --------------------------------------------------------------------------- #
def _reference(x, weight_t, patch_len, stride, padding):
    B, n_vars, _ = x.shape
    d_model = weight_t.shape[1]
    if padding > 0:
        x = jnp.concatenate([x, jnp.repeat(x[..., -1:], padding, axis=-1)], axis=-1)
    L = x.shape[-1]
    P = (L - patch_len) // stride + 1
    idx = (jnp.arange(P) * stride)[:, None] + jnp.arange(patch_len)[None, :]
    patches = x[..., idx].reshape(B * n_vars, P, patch_len)
    pe = jnp.asarray(_positional_embedding_np(P, d_model))
    return patches @ weight_t + pe[None], n_vars


if __name__ == "__main__":
    d_model = 32
    B, n_vars, L = 2, 4, 16

    key = jax.random.PRNGKey(0)
    kx, kw = jax.random.split(key)
    x = jax.random.normal(kx, (B, n_vars, L), dtype=jnp.float32)

    configs = [
        (4, 4, 0),   # stride == patch_len, no padding   -> contiguous-slab path
        (4, 2, 2),   # overlapping patches + replication pad -> fused in-kernel unfold
    ]
    for patch_len, stride, padding in configs:
        # nn.Linear(patch_len, d_model, bias=False) weight is (d_model, patch_len);
        # the kernel keeps the transposed (patch_len, d_model) layout.
        weight_t = (jax.random.normal(kw, (patch_len, d_model), dtype=jnp.float32)
                    * (1.0 / math.sqrt(patch_len)))

        out, nv = patch_embedding(x, weight_t, patch_len, stride, padding)
        out = jax.block_until_ready(out)

        ref, _ = _reference(x, weight_t, patch_len, stride, padding)
        P = (L + padding - patch_len) // stride + 1
        assert out.shape == (B * n_vars, P, d_model), out.shape
        assert nv == n_vars
        assert jnp.allclose(out, ref, atol=1e-5, rtol=1e-5), (patch_len, stride, padding)

    # bf16 operand / output path (memory-bound kernel -> ~2x less HBM traffic);
    # accumulation stays f32, so only bf16 rounding of inputs/output remains.
    patch_len, stride, padding = 4, 4, 0
    weight_t = (jax.random.normal(kw, (patch_len, d_model), dtype=jnp.float32)
                * (1.0 / math.sqrt(patch_len)))
    out_bf16, _ = patch_embedding(x, weight_t, patch_len, stride, padding,
                                  io_dtype=jnp.bfloat16, out_dtype=jnp.bfloat16)
    out_bf16 = jax.block_until_ready(out_bf16)
    ref, _ = _reference(x, weight_t, patch_len, stride, padding)
    assert out_bf16.dtype == jnp.bfloat16
    assert jnp.allclose(out_bf16.astype(jnp.float32), ref, atol=0.25, rtol=0.05)

    print("KERNEL_OK")
</pallas_src>

<mosaic_0001>
module attributes {stable_mosaic.version = 11 : i64} {
  func.func @kernel(%arg0: i32, %arg1: memref<8x16xf32, #tpu.memory_space<vmem>>, %arg2: memref<16x128xf32, #tpu.memory_space<vmem>>, %arg3: memref<1x128xf32, #tpu.memory_space<vmem>>, %arg4: memref<8x128xf32, #tpu.memory_space<vmem>>) attributes {dimension_semantics = [#tpu.dimension_semantics<parallel>], iteration_bounds = array<i64: 1>, scalar_prefetch = 0 : i64, scratch_operands = 0 : i64, tpu.core_type = #tpu.core_type<tc>, window_params = [{transform_indices = @transform_0, window_bounds = array<i64: 8, 16>}, {pipeline_mode = #tpu.pipeline_mode<synchronous>, transform_indices = @transform_1, window_bounds = array<i64: 16, 128>}, {pipeline_mode = #tpu.pipeline_mode<synchronous>, transform_indices = @transform_2, window_bounds = array<i64: 1, 128>}, {transform_indices = @transform_3, window_bounds = array<i64: 8, 128>}]} {
    %c0 = arith.constant 0 : index
    %c0_0 = arith.constant 0 : index
    %0 = vector.load %arg1[%c0, %c0_0] : memref<8x16xf32, #tpu.memory_space<vmem>>, vector<8x16xf32>
    %c0_1 = arith.constant 0 : index
    %c0_2 = arith.constant 0 : index
    %1 = vector.load %arg2[%c0_1, %c0_2] : memref<16x128xf32, #tpu.memory_space<vmem>>, vector<16x128xf32>
    %cst = arith.constant dense<0.000000e+00> : vector<8x128xf32>
    %2 = tpu.matmul %0, %1, %cst {dimension_numbers = #tpu.dot_dimension_numbers<[1], [0], [0], [1], [0, 0, 1, 1], [], []>} : vector<8x16xf32>, vector<16x128xf32>, vector<8x128xf32> -> vector<8x128xf32>
    %c0_3 = arith.constant 0 : index
    %c0_4 = arith.constant 0 : index
    %3 = vector.load %arg3[%c0_3, %c0_4] : memref<1x128xf32, #tpu.memory_space<vmem>>, vector<1x128xf32>
    %4 = vector.broadcast %3 : vector<1x128xf32> to vector<8x128xf32>
    %5 = arith.addf %2, %4 : vector<8x128xf32>
    %c0_5 = arith.constant 0 : index
    %c0_6 = arith.constant 0 : index
    %6 = vector.load %arg4[%c0_5, %c0_6] : memref<8x128xf32, #tpu.memory_space<vmem>>, vector<8x128xf32>
    tpu.vector_store %arg4[%c0_5, %c0_6], %5 {strides = array<i32>} : memref<8x128xf32, #tpu.memory_space<vmem>>, vector<8x128xf32>,
    return
  }
  func.func @transform_0(%arg0: i32) -> (i32, i32) {
    %c0_i32 = arith.constant 0 : i32
    %c0_i32_0 = arith.constant 0 : i32
    return %arg0, %c0_i32 : i32, i32
  }
  func.func @transform_1(%arg0: i32) -> (i32, i32) {
    %c0_i32 = arith.constant 0 : i32
    %c0_i32_0 = arith.constant 0 : i32
    %c0_i32_1 = arith.constant 0 : i32
    return %c0_i32, %c0_i32_0 : i32, i32
  }
  func.func @transform_2(%arg0: i32) -> (i32, i32) {
    %c0_i32 = arith.constant 0 : i32
    %c0_i32_0 = arith.constant 0 : i32
    %c0_i32_1 = arith.constant 0 : i32
    return %c0_i32, %c0_i32_0 : i32, i32
  }
  func.func @transform_3(%arg0: i32) -> (i32, i32) {
    %c0_i32 = arith.constant 0 : i32
    %c0_i32_0 = arith.constant 0 : i32
    return %arg0, %c0_i32 : i32, i32
  }
}

</mosaic_0001>

<llo_original>
// kernel: tpu_custom_call.1
$region0: #{tpu_custom_call.1}
  #allocation0 [shape = 'u32[]', space=smem, size = 0x4, offset = 0x4, fixed_abs, tag = 'smem constant byte address 0x4 - core index']
  #allocation1 [shape = 'u32[72,128]{1,0:T(1,128)}', space=vmem, size = 0x9000, scoped, tag = 'internal scratch']
  %s0 = inlined_call_operand.hbm [shape: f32[8,16], index: 0, kind: input, shape index: {}]
  %s1 = inlined_call_operand.hbm [shape: f32[16,128], index: 1, kind: input, shape index: {}]
  %s2 = inlined_call_operand.vmem [shape: f32[1,128], index: 2, kind: input, shape index: {}]
  %s3 = inlined_call_operand.hbm [shape: f32[8,128], index: 3, kind: output, shape index: {}]
  %s4 = sld [smem:[#allocation0]]
  $region30: #{tpu_custom_call.1} parent=0
    _
  %s6 = ssub.s32 1, %s4
  %s7 = scalar_select 0, %s6, %s4
  $region1: #{tpu_custom_call.1} parent=0
    #allocation2 [shape = 'u8[4096]{0}', space=vmem, size = 0x1000, scoped, tag = 'input window, operand 0, single buffered']
    #allocation3 [shape = 's32[1]{0}', space=sflag, size = 0x4, scoped, tag = 'scoped memory for tpu_custom_call.1']
    #allocation4 [shape = 's32[1]{0}', space=sflag, size = 0x4, scoped, tag = 'scoped memory for tpu_custom_call.1']
    #allocation5 [shape = 'u8[8192]{0}', space=vmem, size = 0x2000, scoped, tag = 'input window, operand 1, single buffered']
    #allocation6 [shape = 's32[1]{0}', space=sflag, size = 0x4, scoped, tag = 'scoped memory for tpu_custom_call.1']
    #allocation7 [shape = 'u8[4096]{0}', space=vmem, size = 0x1000, scoped, tag = 'output window, operand 0, single buffered']
    %8 = vsyncpa [#allocation3], 0
    %9 = vsyncpa [#allocation6], 0
    %10 = vsyncpa [#allocation4], 0
    // Predicated region
    $region2: #{tpu_custom_call.1} parent=1 // pred_check
      _
    $region3: #{tpu_custom_call.1} parent=1 // pred_check_branch
      %12 = sbr.rel (0) target = $region5
    $region4: #{tpu_custom_call.1} parent=1 // pred_region
      %14 = vsyncadd [#allocation3], 0
      %s16 = sshll.u32 %s0, 4
      %s17 = int_to_ptr.hbm [resolvable:$true] %s16
      %s18 = sshll.u32 [#allocation2], 4
      %s19 = int_to_ptr.vmem [resolvable:$true] %s18
      %21 = dma.hbm_to_vmem [thread:$0]  %s17, 128, %s19, [#allocation3]
    $region5: #{tpu_custom_call.1} parent=1 // pred_fallthru
      _
    // Predicated region
    $region6: #{tpu_custom_call.1} parent=1 // pred_check
      _
    $region7: #{tpu_custom_call.1} parent=1 // pred_check_branch
      %23 = sbr.rel (0) target = $region9
    $region8: #{tpu_custom_call.1} parent=1 // pred_region
      %25 = vsyncadd [#allocation6], 0
      %s26 = sshll.u32 %s1, 4
      %s27 = int_to_ptr.hbm [resolvable:$true] %s26
      %s28 = sshll.u32 [#allocation5], 4
      %s29 = int_to_ptr.vmem [resolvable:$true] %s28
      %34 = dma.hbm_to_vmem [thread:$0]  %s27, 256, %s29, [#allocation6], 128, 128, 8
    $region9: #{tpu_custom_call.1} parent=1 // pred_fallthru
      _
    // Predicated region
    $region10: #{tpu_custom_call.1} parent=1 // pred_check
      _
    $region11: #{tpu_custom_call.1} parent=1 // pred_check_branch
      %36 = sbr.rel (0) target = $region13
    $region12: #{tpu_custom_call.1} parent=1 // pred_region
      _
    $region13: #{tpu_custom_call.1} parent=1 // pred_fallthru
      _
    // Predicated region
    $region14: #{tpu_custom_call.1} parent=1 // pred_check
      _
    $region15: #{tpu_custom_call.1} parent=1 // pred_check_branch
      %38 = sbr.rel (0) target = $region17
    $region16: #{tpu_custom_call.1} parent=1 // pred_region
      %40 = dma.done [#allocation3], 128
    $region17: #{tpu_custom_call.1} parent=1 // pred_fallthru
      _
    // Predicated region
    $region18: #{tpu_custom_call.1} parent=1 // pred_check
      _
    $region19: #{tpu_custom_call.1} parent=1 // pred_check_branch
      %42 = sbr.rel (0) target = $region21
    $region20: #{tpu_custom_call.1} parent=1 // pred_region
      %44 = dma.done [#allocation6], 256
    $region21: #{tpu_custom_call.1} parent=1 // pred_fallthru
      _
    %v45 = vld [vmem:[#allocation2] sm:$0xff]
    %v46 = vld [vmem:[#allocation5] sm:$0xff]
    %v47 = vld [vmem:[#allocation5 + $0x8] sm:$0xff]
    %v48 = vld [vmem:[%s2] sm:$0x1]
    %v50 = vperm.slane %v48, 0
    %vm52 = vcmask 130048
    %v54 = vsel %vm52, %v45, 0
    %56 = vmatpush.msra.mxu0 0.0
    %57 = vmatpush.msra.mxu0 0.0
    %58 = vmatpush.msra.mxu0 0.0
    %59 = vmatpush.msra.mxu0 0.0
    %60 = vmatpush.msra.mxu0 0.0
    %61 = vmatpush.msra.mxu0 0.0
    %62 = vmatpush.msra.mxu0 0.0
    %63 = vmatpush.msra.mxu0 0.0
    %64 = vmatpush.msra.mxu0 0.0
    %65 = vmatpush.msra.mxu0 0.0
    %66 = vmatpush.msra.mxu0 0.0
    %67 = vmatpush.msra.mxu0 0.0
    %68 = vmatpush.msra.mxu0 0.0
    %69 = vmatpush.msra.mxu0 0.0
    %70 = vmatpush.msra.mxu0 %v47
    %71 = vmatpush.msra.mxu0 %v46
    %72 = vmatmul.f32.gmra.mxu0 %v54
    %v73 = vpop.f32.mrf.mxu0
    %v74 = vadd.f32 %v50, %v73
    %75 = vdwg.mxu0
    %76 = vst [vmem:[#allocation7] sm:$0xff] %v74
    // Predicated region
    $region22: #{tpu_custom_call.1} parent=1 // pred_check
      _
    $region23: #{tpu_custom_call.1} parent=1 // pred_check_branch
      %78 = sbr.rel (0) target = $region25
    $region24: #{tpu_custom_call.1} parent=1 // pred_region
      %80 = vsyncadd [#allocation4], 0
      %s82 = sshll.u32 [#allocation7], 4
      %s83 = int_to_ptr.vmem [resolvable:$true] %s82
      %s84 = sshll.u32 %s3, 4
      %s85 = int_to_ptr.hbm [resolvable:$true] %s84
      %87 = dma.vmem_to_hbm [thread:$0]  %s83, 128, %s85, [#allocation4]
    $region25: #{tpu_custom_call.1} parent=1 // pred_fallthru
      _
    // Predicated region
    $region26: #{tpu_custom_call.1} parent=1 // pred_check
      _
    $region27: #{tpu_custom_call.1} parent=1 // pred_check_branch
      %89 = sbr.rel (0) target = $region29
    $region28: #{tpu_custom_call.1} parent=1 // pred_region
      %91 = dma.done [#allocation4], 128
    $region29: #{tpu_custom_call.1} parent=1 // pred_fallthru
      _
    %92 = vsyncpa [#allocation3], 1
    %93 = vsyncpa [#allocation6], 1
    %94 = vsyncpa [#allocation4], 1

</llo_original>
